<compile_context>
chip_gen: v7x
topology: tpu7x:2x2x1
jax: 0.10.0
libtpu: 0.0.40
codegen_flags: <defaults>
</compile_context>

<pallas_src>
import jax
import jax.numpy as jnp
from jax.experimental import pallas as pl
from jax.experimental.pallas import tpu as pltpu


def build_grid(resolution):
    """JAX port of the PyTorch build_grid: returns (1, H, W, 4) float32."""
    ranges = [jnp.linspace(0.0, 1.0, num=res) for res in resolution]
    grid = jnp.meshgrid(*ranges, indexing="ij")          # torch.meshgrid default is 'ij'
    grid = jnp.stack(grid, axis=-1)                      # (H, W, 2)
    grid = jnp.reshape(grid, (resolution[0], resolution[1], -1))
    grid = grid[None]                                    # (1, H, W, 2)
    return jnp.concatenate([grid, 1.0 - grid], axis=-1)  # (1, H, W, 4)


def _add_pos_kernel(pos_ref, x_ref, o_ref):
    """Elementwise add on the VPU.

    pos_ref: (r_tile, L) f32        batch-invariant positional embedding tile
    x_ref:   (b_tile, r_tile, L)    input tile (one or more batch elements)
    o_ref:   (b_tile, r_tile, L)    output tile
    """
    o_ref[...] = (x_ref[...].astype(jnp.float32)
                  + pos_ref[...][None, :, :]).astype(o_ref.dtype)


def _pick_dense_2d(HW, C):
    """Factor HW*C into (rows, lanes) with lanes % 128 == 0 and rows % 8 == 0 where
    possible so every VMEM tile is a full (8,128) vreg tile."""
    total = HW * C
    for lanes in (4096, 2048, 1024, 512, 256, 128):
        if total % lanes == 0:
            rows = total // lanes
            if rows % 8 == 0 or rows == 1:
                return rows, lanes
    if total % 128 == 0:
        # rows may not be a multiple of 8; the tiler then uses full-R blocks (legal).
        return total // 128, 128
    # Last resort: natural layout; blocks use full array dims (legal, possibly masked).
    return HW, C


def _pick_tiling(B, R, L, x_itemsize, vmem_budget_bytes=12 * 1024 * 1024):
    """Choose (b_tile, r_tile) so that the double-buffered working set
    (x + out in x dtype, pos in f32) stays under `vmem_budget_bytes`."""
    # Per block element: 2 pipeline buffers * (x + out + f32 pos).
    bytes_per_elem = 2 * (2 * x_itemsize + 4)
    max_block_elems = max(1, vmem_budget_bytes // bytes_per_elem)
    max_rows = max(1, max_block_elems // L)

    # Row tile: largest divisor of R that is a multiple of 8 (for (8,128) tiling) and
    # fits the budget; r_tile == R (full extent) is always legal.
    if R <= max_rows:
        r_tile = R
    else:
        cands = [d for d in range(8, R + 1, 8) if R % d == 0]
        fitting = [d for d in cands if d <= max_rows]
        if fitting:
            r_tile = max(fitting)
        elif cands:
            r_tile = min(cands)   # smallest legal tile; slightly over budget is rare
        else:
            r_tile = R            # R not a multiple of 8: only the full extent is legal

    # Batch aggregation: if the whole row extent fits, pack several batch elements per
    # grid step to amortize per-step pipeline overhead on small resolutions.
    b_tile = 1
    if r_tile == R:
        max_b = max(1, max_rows // R)
        for cand in range(min(B, max_b), 0, -1):
            if B % cand == 0:
                b_tile = cand
                break
    return b_tile, r_tile


def soft_position_embed(inputs, grid, weight, bias):
    """inputs: (B, H, W, C) NHWC; grid: (1, H, W, 4); weight: (C, 4) (nn.Linear layout);
    bias: (C,).  Returns inputs + Linear(grid), matching SoftPositionEmbed.forward."""
    B, H, W, C = inputs.shape
    HW = H * W

    # ---- Hoisted, batch-invariant positional embedding (plain JAX, done once) ----
    # Kept in f32: with the batch-innermost grid it is read from HBM only once total,
    # so its extra bytes are negligible while preserving f32 accumulation accuracy.
    pos = (grid.reshape(HW, 4).astype(jnp.float32)
           @ weight.T.astype(jnp.float32)
           + bias.astype(jnp.float32))                     # (HW, C) f32

    # ---- Lane-dense flattening ----
    R, L = _pick_dense_2d(HW, C)                           # R*L == HW*C
    x3 = inputs.reshape(B, R, L)                           # (B, R, L)
    pos2 = pos.reshape(R, L)                               # (R, L) f32

    # ---- Byte-budgeted tiling (fits default scoped VMEM on v5e/v6e/v7x) ----
    b_tile, r_tile = _pick_tiling(B, R, L, inputs.dtype.itemsize)
    n_r = R // r_tile
    n_b = B // b_tile

    out3 = pl.pallas_call(
        _add_pos_kernel,
        out_shape=jax.ShapeDtypeStruct((B, R, L), inputs.dtype),
        grid_spec=pltpu.PrefetchScalarGridSpec(
            num_scalar_prefetch=0,
            # Rows outer, batch INNER: pos's block index is constant across consecutive
            # steps, so Pallas skips re-DMAing it (pos read once total, not B times).
            grid=(n_r, n_b),
            in_specs=[
                pl.BlockSpec((r_tile, L), lambda r, b: (r, 0)),           # pos
                pl.BlockSpec((b_tile, r_tile, L), lambda r, b: (b, r, 0)),  # x
            ],
            out_specs=pl.BlockSpec((b_tile, r_tile, L), lambda r, b: (b, r, 0)),
        ),
        # Shard the row axis across v7x's 2 TCs; keep batch sequential per core so the
        # pos revisit optimization holds on each core.  Neutral on v5e/v6e (1 TC).
        compiler_params=pltpu.CompilerParams(
            dimension_semantics=("parallel", "arbitrary")),
        # Write the output in place of the (flattened) input: saves one HBM allocation.
        input_output_aliases={1: 0},
    )(pos2, x3)

    return out3.reshape(B, H, W, C)


if __name__ == "__main__":
    key = jax.random.PRNGKey(0)
    k_x, k_w, k_b = jax.random.split(key, 3)

    B, H, W, C = 2, 16, 16, 32        # hidden_size=32, resolution=(16, 16)

    inputs = jax.random.normal(k_x, (B, H, W, C), dtype=jnp.float32)
    # deterministic "nn.Linear(4, C)" parameters, (out, in) layout like torch
    weight = jax.random.normal(k_w, (C, 4), dtype=jnp.float32) * 0.5
    bias = jax.random.normal(k_b, (C,), dtype=jnp.float32) * 0.1

    grid = build_grid((H, W))         # (1, H, W, 4)

    # Reference computed first (kernel donates its flattened input buffer).
    ref = inputs + (grid.reshape(1, H * W, 4) @ weight.T + bias).reshape(1, H, W, C)
    ref = jax.block_until_ready(ref)

    fn = jax.jit(soft_position_embed)
    out = fn(inputs, grid, weight, bias)
    out = jax.block_until_ready(out)

    assert out.shape == (B, H, W, C)
    assert jnp.allclose(out, ref, atol=1e-5, rtol=1e-5), "mismatch vs reference"

    print("KERNEL_OK")
</pallas_src>

<mosaic_0001>
module attributes {stable_mosaic.version = 11 : i64} {
  func.func @_add_pos_kernel(%arg0: i32, %arg1: i32, %arg2: memref<8x1024xf32, #tpu.memory_space<vmem>>, %arg3: memref<2x8x1024xf32, #tpu.memory_space<vmem>>, %arg4: memref<2x8x1024xf32, #tpu.memory_space<vmem>>) attributes {dimension_semantics = [#tpu.dimension_semantics<parallel>, #tpu.dimension_semantics<arbitrary>], iteration_bounds = array<i64: 1, 1>, scalar_prefetch = 0 : i64, scratch_operands = 0 : i64, tpu.core_type = #tpu.core_type<tc>, window_params = [{transform_indices = @transform_0, window_bounds = array<i64: 8, 1024>}, {transform_indices = @transform_1, window_bounds = array<i64: 2, 8, 1024>}, {transform_indices = @transform_2, window_bounds = array<i64: 2, 8, 1024>}]} {
    %c0 = arith.constant 0 : index
    %c0_0 = arith.constant 0 : index
    %c0_1 = arith.constant 0 : index
    %0 = vector.load %arg3[%c0, %c0_0, %c0_1] : memref<2x8x1024xf32, #tpu.memory_space<vmem>>, vector<2x8x1024xf32>
    %c0_2 = arith.constant 0 : index
    %c0_3 = arith.constant 0 : index
    %1 = vector.load %arg2[%c0_2, %c0_3] : memref<8x1024xf32, #tpu.memory_space<vmem>>, vector<8x1024xf32>
    %2 = vector.shape_cast %1 : vector<8x1024xf32> to vector<1x8x1024xf32>
    %3 = vector.broadcast %2 : vector<1x8x1024xf32> to vector<2x8x1024xf32>
    %4 = arith.addf %0, %3 : vector<2x8x1024xf32>
    %c0_4 = arith.constant 0 : index
    %c0_5 = arith.constant 0 : index
    %c0_6 = arith.constant 0 : index
    %5 = vector.load %arg4[%c0_4, %c0_5, %c0_6] : memref<2x8x1024xf32, #tpu.memory_space<vmem>>, vector<2x8x1024xf32>
    tpu.vector_store %arg4[%c0_4, %c0_5, %c0_6], %4 {strides = array<i32>} : memref<2x8x1024xf32, #tpu.memory_space<vmem>>, vector<2x8x1024xf32>,
    return
  }
  func.func @transform_0(%arg0: i32, %arg1: i32) -> (i32, i32) {
    %c0_i32 = arith.constant 0 : i32
    %c0_i32_0 = arith.constant 0 : i32
    return %arg0, %c0_i32 : i32, i32
  }
  func.func @transform_1(%arg0: i32, %arg1: i32) -> (i32, i32, i32) {
    %c0_i32 = arith.constant 0 : i32
    %c0_i32_0 = arith.constant 0 : i32
    return %arg1, %arg0, %c0_i32 : i32, i32, i32
  }
  func.func @transform_2(%arg0: i32, %arg1: i32) -> (i32, i32, i32) {
    %c0_i32 = arith.constant 0 : i32
    %c0_i32_0 = arith.constant 0 : i32
    return %arg1, %arg0, %c0_i32 : i32, i32, i32
  }
}

</mosaic_0001>

<llo_original>
// kernel: soft_position_embed.1
$region0: #{soft_position_embed.1}
  #allocation0 [shape = 'u32[]', space=smem, size = 0x4, offset = 0x4, fixed_abs, tag = 'smem constant byte address 0x4 - core index']
  #allocation1 [shape = 'u32[144,128]{1,0:T(1,128)}', space=vmem, size = 0x12000, scoped, tag = 'internal scratch']
  %s0 = inlined_call_operand.vmem [shape: f32[8,1024], index: 0, kind: input, shape index: {}]
  %s1 = inlined_call_operand.vmem [shape: f32[2,8,1024], index: 1, kind: input, shape index: {}, may-alias: {1,2}]
  %s2 = inlined_call_operand.vmem [shape: f32[2,8,1024], index: 2, kind: output, shape index: {}, may-alias: {1,2}]
  %s3 = sld [smem:[#allocation0]]
  $region18: #{soft_position_embed.1} parent=0
    _
  %s5 = ssub.s32 1, %s3
  %s6 = scalar_select 0, %s5, %s3
  // Predicated region
  $region2: #{soft_position_embed.1} parent=0 // pred_check
    _
  $region3: #{soft_position_embed.1} parent=0 // pred_check_branch
    %8 = sbr.rel (0) target = $region5
  $region4: #{soft_position_embed.1} parent=0 // pred_region
    _
  $region5: #{soft_position_embed.1} parent=0 // pred_fallthru
    _
  // Predicated region
  $region6: #{soft_position_embed.1} parent=0 // pred_check
    _
  $region7: #{soft_position_embed.1} parent=0 // pred_check_branch
    %10 = sbr.rel (0) target = $region9
  $region8: #{soft_position_embed.1} parent=0 // pred_region
    _
  $region9: #{soft_position_embed.1} parent=0 // pred_fallthru
    _
  %v11 = vld [vmem:[%s1] sm:$0xff]
  %v12 = vld [vmem:[%s1 + $0x8] sm:$0xff]
  %v13 = vld [vmem:[%s1 + $0x10] sm:$0xff]
  %v14 = vld [vmem:[%s1 + $0x18] sm:$0xff]
  %v15 = vld [vmem:[%s1 + $0x20] sm:$0xff]
  %v16 = vld [vmem:[%s1 + $0x28] sm:$0xff]
  %v17 = vld [vmem:[%s1 + $0x30] sm:$0xff]
  %v18 = vld [vmem:[%s1 + $0x38] sm:$0xff]
  %v19 = vld [vmem:[%s1 + $0x40] sm:$0xff]
  %v20 = vld [vmem:[%s1 + $0x48] sm:$0xff]
  %v21 = vld [vmem:[%s1 + $0x50] sm:$0xff]
  %v22 = vld [vmem:[%s1 + $0x58] sm:$0xff]
  %v23 = vld [vmem:[%s1 + $0x60] sm:$0xff]
  %v24 = vld [vmem:[%s1 + $0x68] sm:$0xff]
  %v25 = vld [vmem:[%s1 + $0x70] sm:$0xff]
  %v26 = vld [vmem:[%s1 + $0x78] sm:$0xff]
  %v27 = vld [vmem:[%s0] sm:$0xff]
  %v28 = vld [vmem:[%s0 + $0x8] sm:$0xff]
  %v29 = vld [vmem:[%s0 + $0x10] sm:$0xff]
  %v30 = vld [vmem:[%s0 + $0x18] sm:$0xff]
  %v31 = vld [vmem:[%s0 + $0x20] sm:$0xff]
  %v32 = vld [vmem:[%s0 + $0x28] sm:$0xff]
  %v33 = vld [vmem:[%s0 + $0x30] sm:$0xff]
  %v34 = vld [vmem:[%s0 + $0x38] sm:$0xff]
  %v35 = vadd.f32 %v11, %v27
  %v36 = vadd.f32 %v12, %v28
  %v37 = vadd.f32 %v13, %v29
  %v38 = vadd.f32 %v14, %v30
  %v39 = vadd.f32 %v15, %v31
  %v40 = vadd.f32 %v16, %v32
  %v41 = vadd.f32 %v17, %v33
  %v42 = vadd.f32 %v18, %v34
  %v43 = vadd.f32 %v19, %v27
  %v44 = vadd.f32 %v20, %v28
  %v45 = vadd.f32 %v21, %v29
  %v46 = vadd.f32 %v22, %v30
  %v47 = vadd.f32 %v23, %v31
  %v48 = vadd.f32 %v24, %v32
  %v49 = vadd.f32 %v25, %v33
  %v50 = vadd.f32 %v26, %v34
  %51 = vst [vmem:[%s2] sm:$0xff] %v35
  %52 = vst [vmem:[%s2 + $0x8] sm:$0xff] %v36
  %53 = vst [vmem:[%s2 + $0x10] sm:$0xff] %v37
  %54 = vst [vmem:[%s2 + $0x18] sm:$0xff] %v38
  %55 = vst [vmem:[%s2 + $0x20] sm:$0xff] %v39
  %56 = vst [vmem:[%s2 + $0x28] sm:$0xff] %v40
  %57 = vst [vmem:[%s2 + $0x30] sm:$0xff] %v41
  %58 = vst [vmem:[%s2 + $0x38] sm:$0xff] %v42
  %59 = vst [vmem:[%s2 + $0x40] sm:$0xff] %v43
  %60 = vst [vmem:[%s2 + $0x48] sm:$0xff] %v44
  %61 = vst [vmem:[%s2 + $0x50] sm:$0xff] %v45
  %62 = vst [vmem:[%s2 + $0x58] sm:$0xff] %v46
  %63 = vst [vmem:[%s2 + $0x60] sm:$0xff] %v47
  %64 = vst [vmem:[%s2 + $0x68] sm:$0xff] %v48
  %65 = vst [vmem:[%s2 + $0x70] sm:$0xff] %v49
  %66 = vst [vmem:[%s2 + $0x78] sm:$0xff] %v50
  // Predicated region
  $region10: #{soft_position_embed.1} parent=0 // pred_check
    _
  $region11: #{soft_position_embed.1} parent=0 // pred_check_branch
    %68 = sbr.rel (0) target = $region13
  $region12: #{soft_position_embed.1} parent=0 // pred_region
    _
  $region13: #{soft_position_embed.1} parent=0 // pred_fallthru
    _
  // Predicated region
  $region14: #{soft_position_embed.1} parent=0 // pred_check
    _
  $region15: #{soft_position_embed.1} parent=0 // pred_check_branch
    %70 = sbr.rel (0) target = $region17
  $region16: #{soft_position_embed.1} parent=0 // pred_region
    _
  $region17: #{soft_position_embed.1} parent=0 // pred_fallthru
    _

</llo_original>
